<compile_context>
chip_gen: v6e
topology: v6e:2x2x1
jax: 0.10.0
libtpu: 0.0.40
codegen_flags: <defaults>
</compile_context>

<pallas_src>
import jax
import jax.numpy as jnp
import numpy as np
from jax.experimental import pallas as pl
from jax.experimental.pallas import tpu as pltpu


def self_attn_c_kernel(x_ref, wqkv_ref, bqkv_ref, wo_ref, bo_ref, gamma_ref,
                       out_ref, attn_ref):
    block_b = x_ref.shape[0]
    c = attn_ref.shape[-1]

    gamma = gamma_ref[0, 0]
    wqkv = wqkv_ref[...]            # (3c, C)
    bqkv = bqkv_ref[...]            # (3c, 1)
    # gamma folded into the small matrices once per grid step
    # (instead of a full C*N VPU multiply on the output).
    wo_g = gamma * wo_ref[...]      # (C, c)
    bo_g = gamma * bo_ref[...]      # (C, 1)

    for b in range(block_b):        # static unroll; block_b is small
        x = x_ref[b]                # (C, N)

        # Fused q/k/v projection: one MXU pass with M = 3c.
        qkv = jnp.dot(wqkv, x, preferred_element_type=jnp.float32) + bqkv   # (3c, N)
        q = qkv[0 * c:1 * c]
        k = qkv[1 * c:2 * c]
        v = qkv[2 * c:3 * c]

        # energy[i, j] = sum_n k[i, n] * q[j, n]  -> (c, c)
        energy = jax.lax.dot_general(k, q, (((1,), (1,)), ((), ())),
                                     preferred_element_type=jnp.float32)

        # softmax along last dim (dim=-1 in PyTorch), exact (keeps 1e-5 tol)
        m = jnp.max(energy, axis=-1, keepdims=True)
        e = jnp.exp(energy - m)
        attn = e / jnp.sum(e, axis=-1, keepdims=True)                       # (c, c)
        attn_ref[b] = attn

        # Reassociated epilogue: w_eff = (gamma*Wo) @ attn^T -> (C, c), then a
        # single (C, c) x (c, N) matmul.  Identical to
        # gamma * (Wo @ (attn^T @ v) + bo) but skips the (c, N) intermediate.
        w_eff = jax.lax.dot_general(wo_g, attn, (((1,), (1,)), ((), ())),
                                    preferred_element_type=jnp.float32)     # (C, c)
        out_ref[b] = jnp.dot(w_eff, v, preferred_element_type=jnp.float32) + bo_g


def self_attn_c(x_nchw, wq, bq, wk, bk, wv, bv, wo, bo, gamma, block_b=None):
    B, C, H, W = x_nchw.shape
    N = H * W
    c = wq.shape[0]
    xf = x_nchw.reshape(B, C, N)

    # Fuse the three projection weights/biases (done once; tiny arrays).
    wqkv = jnp.concatenate([wq, wk, wv], axis=0)   # (3c, C)
    bqkv = jnp.concatenate([bq, bk, bv], axis=0)   # (3c, 1)

    # Samples per grid step: amortize per-step fixed cost; for even B >= 4 keep
    # a parallel grid extent of 2 so both v7x TensorCores stay busy.
    if block_b is None:
        if B % 2 == 0 and B >= 4:
            block_b = B // 2
        elif B <= 4:
            block_b = B            # tiny batch: single step amortizes everything
        else:
            block_b = 1
    assert B % block_b == 0, "block_b must divide batch"
    grid = (B // block_b,)

    def const_spec(shape):
        return pl.BlockSpec(shape, lambda i: (0,) * len(shape))

    # Per-step VMEM footprint is tiny at these shapes; for large C*N on v7x
    # (64 MiB physical VMEM) set pltpu.CompilerParams(vmem_limit_bytes=...) and
    # tile N with a two-phase (accumulate-energy / apply-attn) structure.
    out, attn = pl.pallas_call(
        self_attn_c_kernel,
        out_shape=(jax.ShapeDtypeStruct((B, C, N), jnp.float32),
                   jax.ShapeDtypeStruct((B, c, c), jnp.float32)),
        grid=grid,
        in_specs=[
            pl.BlockSpec((block_b, C, N), lambda i: (i, 0, 0)),      # x
            const_spec((3 * c, C)),                                  # fused Wq|Wk|Wv
            const_spec((3 * c, 1)),                                  # fused bq|bk|bv
            const_spec((C, c)),                                      # Wout
            const_spec((C, 1)),                                      # bout
            pl.BlockSpec(memory_space=pltpu.MemorySpace.SMEM),       # gamma (1,1)
        ],
        out_specs=(pl.BlockSpec((block_b, C, N), lambda i: (i, 0, 0)),
                   pl.BlockSpec((block_b, c, c), lambda i: (i, 0, 0))),
        compiler_params=pltpu.CompilerParams(dimension_semantics=("parallel",)),
    )(xf, wqkv, bqkv, wo, bo, gamma)

    return out.reshape(B, C, H, W), attn


def _reference(x, wq, bq, wk, bk, wv, bv, wo, bo, gamma):
    B, C, H, W = x.shape
    N = H * W
    xf = x.reshape(B, C, N)
    q = jnp.einsum('oc,bcn->bon', wq, xf) + bq[None]
    k = jnp.einsum('oc,bcn->bon', wk, xf) + bk[None]
    v = jnp.einsum('oc,bcn->bon', wv, xf) + bv[None]
    energy = jnp.einsum('bin,bjn->bij', k, q)
    attn = jax.nn.softmax(energy, axis=-1)
    o = jnp.einsum('bki,bkn->bin', attn, v)
    out = jnp.einsum('oc,bcn->bon', wo, o) + bo[None]
    out = gamma[0, 0] * out
    return out.reshape(B, C, H, W), attn


def _run_case(B, C, H, W, latent_dim, case_id):
    c = C // latent_dim
    key = jax.random.fold_in(jax.random.PRNGKey(0), case_id)
    ks = jax.random.split(key, 10)
    x = jax.random.normal(ks[0], (B, C, H, W), jnp.float32)
    wq = 0.1 * jax.random.normal(ks[1], (c, C), jnp.float32)
    bq = 0.1 * jax.random.normal(ks[2], (c, 1), jnp.float32)
    wk = 0.1 * jax.random.normal(ks[3], (c, C), jnp.float32)
    bk = 0.1 * jax.random.normal(ks[4], (c, 1), jnp.float32)
    wv = 0.1 * jax.random.normal(ks[5], (c, C), jnp.float32)
    bv = 0.1 * jax.random.normal(ks[6], (c, 1), jnp.float32)
    wo = 0.1 * jax.random.normal(ks[7], (C, c), jnp.float32)
    bo = 0.1 * jax.random.normal(ks[8], (C, 1), jnp.float32)
    # PyTorch __init__ sets gamma = zeros(1); use a deterministic nonzero value
    # so the output path is actually exercised.
    gamma = jnp.full((1, 1), 0.5, jnp.float32)

    out, attn = self_attn_c(x, wq, bq, wk, bk, wv, bv, wo, bo, gamma)
    jax.block_until_ready((out, attn))

    ref_out, ref_attn = _reference(x, wq, bq, wk, bk, wv, bv, wo, bo, gamma)
    np.testing.assert_allclose(np.asarray(out), np.asarray(ref_out), rtol=1e-5, atol=1e-5)
    np.testing.assert_allclose(np.asarray(attn), np.asarray(ref_attn), rtol=1e-5, atol=1e-5)


if __name__ == "__main__":
    # Primary (module-sized): B=2 -> block_b=2, single grid step (fixed cost
    # amortized across the whole batch).
    _run_case(B=2, C=64, H=16, W=16, latent_dim=8, case_id=0)
    # Secondary: B=4 -> block_b=2, grid extent 2 ("parallel"), exercising the
    # multi-step / two-TensorCore (v7x) path.
    _run_case(B=4, C=64, H=16, W=16, latent_dim=8, case_id=1)
    print("KERNEL_OK")
</pallas_src>

<mosaic_0001>
module attributes {stable_mosaic.version = 11 : i64} {
  func.func @self_attn_c_kernel(%arg0: i32, %arg1: memref<2x64x256xf32, #tpu.memory_space<vmem>>, %arg2: memref<24x64xf32, #tpu.memory_space<vmem>>, %arg3: memref<24x1xf32, #tpu.memory_space<vmem>>, %arg4: memref<64x8xf32, #tpu.memory_space<vmem>>, %arg5: memref<64x1xf32, #tpu.memory_space<vmem>>, %arg6: memref<1x1xf32, #tpu.memory_space<smem>>, %arg7: memref<2x64x256xf32, #tpu.memory_space<vmem>>, %arg8: memref<2x8x8xf32, #tpu.memory_space<vmem>>) attributes {dimension_semantics = [#tpu.dimension_semantics<parallel>], iteration_bounds = array<i64: 1>, scalar_prefetch = 0 : i64, scratch_operands = 0 : i64, tpu.core_type = #tpu.core_type<tc>, window_params = [{transform_indices = @transform_0, window_bounds = array<i64: 2, 64, 256>}, {pipeline_mode = #tpu.pipeline_mode<synchronous>, transform_indices = @transform_1, window_bounds = array<i64: 24, 64>}, {pipeline_mode = #tpu.pipeline_mode<synchronous>, transform_indices = @transform_2, window_bounds = array<i64: 24, 1>}, {pipeline_mode = #tpu.pipeline_mode<synchronous>, transform_indices = @transform_3, window_bounds = array<i64: 64, 8>}, {pipeline_mode = #tpu.pipeline_mode<synchronous>, transform_indices = @transform_4, window_bounds = array<i64: 64, 1>}, {transform_indices = @transform_5, window_bounds = array<i64: 1, 1>}, {transform_indices = @transform_6, window_bounds = array<i64: 2, 64, 256>}, {transform_indices = @transform_7, window_bounds = array<i64: 2, 8, 8>}]} {
    %c0 = arith.constant 0 : index
    %c0_0 = arith.constant 0 : index
    %0 = memref.load %arg6[%c0, %c0_0] : memref<1x1xf32, #tpu.memory_space<smem>>
    %c0_1 = arith.constant 0 : index
    %c0_2 = arith.constant 0 : index
    %1 = vector.load %arg2[%c0_1, %c0_2] : memref<24x64xf32, #tpu.memory_space<vmem>>, vector<24x64xf32>
    %c0_3 = arith.constant 0 : index
    %c0_4 = arith.constant 0 : index
    %2 = vector.load %arg3[%c0_3, %c0_4] : memref<24x1xf32, #tpu.memory_space<vmem>>, vector<24x1xf32>
    %c0_5 = arith.constant 0 : index
    %c0_6 = arith.constant 0 : index
    %3 = vector.load %arg4[%c0_5, %c0_6] : memref<64x8xf32, #tpu.memory_space<vmem>>, vector<64x8xf32>
    %4 = vector.broadcast %0 : f32 to vector<64x8xf32>
    %5 = arith.mulf %4, %3 : vector<64x8xf32>
    %c0_7 = arith.constant 0 : index
    %c0_8 = arith.constant 0 : index
    %6 = vector.load %arg5[%c0_7, %c0_8] : memref<64x1xf32, #tpu.memory_space<vmem>>, vector<64x1xf32>
    %7 = vector.broadcast %0 : f32 to vector<64x1xf32>
    %8 = arith.mulf %7, %6 : vector<64x1xf32>
    %c0_9 = arith.constant 0 : index
    %c0_10 = arith.constant 0 : index
    %c0_11 = arith.constant 0 : index
    %9 = vector.load %arg1[%c0_9, %c0_10, %c0_11] : memref<2x64x256xf32, #tpu.memory_space<vmem>>, vector<1x64x256xf32>
    %10 = vector.shape_cast %9 : vector<1x64x256xf32> to vector<64x256xf32>
    %cst = arith.constant dense<0.000000e+00> : vector<24x256xf32>
    %11 = tpu.matmul %1, %10, %cst {dimension_numbers = #tpu.dot_dimension_numbers<[1], [0], [0], [1], [0, 0, 1, 1], [], []>} : vector<24x64xf32>, vector<64x256xf32>, vector<24x256xf32> -> vector<24x256xf32>
    %12 = vector.broadcast %2 : vector<24x1xf32> to vector<24x256xf32>
    %13 = arith.addf %11, %12 : vector<24x256xf32>
    %14 = vector.extract_strided_slice %13 {offsets = [0, 0], sizes = [8, 256], strides = [1, 1]} : vector<24x256xf32> to vector<8x256xf32>
    %15 = vector.extract_strided_slice %13 {offsets = [8, 0], sizes = [8, 256], strides = [1, 1]} : vector<24x256xf32> to vector<8x256xf32>
    %16 = vector.extract_strided_slice %13 {offsets = [16, 0], sizes = [8, 256], strides = [1, 1]} : vector<24x256xf32> to vector<8x256xf32>
    %cst_12 = arith.constant dense<0.000000e+00> : vector<8x8xf32>
    %17 = tpu.matmul %15, %14, %cst_12 {dimension_numbers = #tpu.dot_dimension_numbers<[1], [1], [0], [0], [0, 0, 1, 0], [], []>} : vector<8x256xf32>, vector<8x256xf32>, vector<8x8xf32> -> vector<8x8xf32>
    %cst_13 = arith.constant dense<0xFF800000> : vector<8xf32>
    %18 = vector.multi_reduction <maximumf>, %17, %cst_13 [1] : vector<8x8xf32> to vector<8xf32>
    %19 = vector.shape_cast %18 : vector<8xf32> to vector<8x1xf32>
    %20 = vector.broadcast %19 : vector<8x1xf32> to vector<8x8xf32>
    %21 = arith.subf %17, %20 : vector<8x8xf32>
    %22 = math.exp %21 : vector<8x8xf32>
    %cst_14 = arith.constant dense<0.000000e+00> : vector<8xf32>
    %23 = vector.multi_reduction <add>, %22, %cst_14 [1] : vector<8x8xf32> to vector<8xf32>
    %24 = vector.shape_cast %23 : vector<8xf32> to vector<8x1xf32>
    %25 = vector.broadcast %24 : vector<8x1xf32> to vector<8x8xf32>
    %26 = arith.divf %22, %25 : vector<8x8xf32>
    %c0_15 = arith.constant 0 : index
    %c0_16 = arith.constant 0 : index
    %c0_17 = arith.constant 0 : index
    %27 = vector.load %arg8[%c0_15, %c0_16, %c0_17] : memref<2x8x8xf32, #tpu.memory_space<vmem>>, vector<1x8x8xf32>
    %28 = vector.shape_cast %27 : vector<1x8x8xf32> to vector<8x8xf32>
    %29 = vector.shape_cast %26 : vector<8x8xf32> to vector<1x8x8xf32>
    tpu.vector_store %arg8[%c0_15, %c0_16, %c0_17], %29 {strides = array<i32>} : memref<2x8x8xf32, #tpu.memory_space<vmem>>, vector<1x8x8xf32>,
    %cst_18 = arith.constant dense<0.000000e+00> : vector<64x8xf32>
    %30 = tpu.matmul %5, %26, %cst_18 {dimension_numbers = #tpu.dot_dimension_numbers<[1], [1], [0], [0], [0, 0, 1, 0], [], []>} : vector<64x8xf32>, vector<8x8xf32>, vector<64x8xf32> -> vector<64x8xf32>
    %cst_19 = arith.constant dense<0.000000e+00> : vector<64x256xf32>
    %31 = tpu.matmul %30, %16, %cst_19 {dimension_numbers = #tpu.dot_dimension_numbers<[1], [0], [0], [1], [0, 0, 1, 1], [], []>} : vector<64x8xf32>, vector<8x256xf32>, vector<64x256xf32> -> vector<64x256xf32>
    %32 = vector.broadcast %8 : vector<64x1xf32> to vector<64x256xf32>
    %33 = arith.addf %31, %32 : vector<64x256xf32>
    %c0_20 = arith.constant 0 : index
    %c0_21 = arith.constant 0 : index
    %c0_22 = arith.constant 0 : index
    %34 = vector.load %arg7[%c0_20, %c0_21, %c0_22] : memref<2x64x256xf32, #tpu.memory_space<vmem>>, vector<1x64x256xf32>
    %35 = vector.shape_cast %34 : vector<1x64x256xf32> to vector<64x256xf32>
    %36 = vector.shape_cast %33 : vector<64x256xf32> to vector<1x64x256xf32>
    tpu.vector_store %arg7[%c0_20, %c0_21, %c0_22], %36 {strides = array<i32>} : memref<2x64x256xf32, #tpu.memory_space<vmem>>, vector<1x64x256xf32>,
    %c1 = arith.constant 1 : index
    %c0_23 = arith.constant 0 : index
    %c0_24 = arith.constant 0 : index
    %37 = vector.load %arg1[%c1, %c0_23, %c0_24] : memref<2x64x256xf32, #tpu.memory_space<vmem>>, vector<1x64x256xf32>
    %38 = vector.shape_cast %37 : vector<1x64x256xf32> to vector<64x256xf32>
    %cst_25 = arith.constant dense<0.000000e+00> : vector<24x256xf32>
    %39 = tpu.matmul %1, %38, %cst_25 {dimension_numbers = #tpu.dot_dimension_numbers<[1], [0], [0], [1], [0, 0, 1, 1], [], []>} : vector<24x64xf32>, vector<64x256xf32>, vector<24x256xf32> -> vector<24x256xf32>
    %40 = vector.broadcast %2 : vector<24x1xf32> to vector<24x256xf32>
    %41 = arith.addf %39, %40 : vector<24x256xf32>
    %42 = vector.extract_strided_slice %41 {offsets = [0, 0], sizes = [8, 256], strides = [1, 1]} : vector<24x256xf32> to vector<8x256xf32>
    %43 = vector.extract_strided_slice %41 {offsets = [8, 0], sizes = [8, 256], strides = [1, 1]} : vector<24x256xf32> to vector<8x256xf32>
    %44 = vector.extract_strided_slice %41 {offsets = [16, 0], sizes = [8, 256], strides = [1, 1]} : vector<24x256xf32> to vector<8x256xf32>
    %cst_26 = arith.constant dense<0.000000e+00> : vector<8x8xf32>
    %45 = tpu.matmul %43, %42, %cst_26 {dimension_numbers = #tpu.dot_dimension_numbers<[1], [1], [0], [0], [0, 0, 1, 0], [], []>} : vector<8x256xf32>, vector<8x256xf32>, vector<8x8xf32> -> vector<8x8xf32>
    %cst_27 = arith.constant dense<0xFF800000> : vector<8xf32>
    %46 = vector.multi_reduction <maximumf>, %45, %cst_27 [1] : vector<8x8xf32> to vector<8xf32>
    %47 = vector.shape_cast %46 : vector<8xf32> to vector<8x1xf32>
    %48 = vector.broadcast %47 : vector<8x1xf32> to vector<8x8xf32>
    %49 = arith.subf %45, %48 : vector<8x8xf32>
    %50 = math.exp %49 : vector<8x8xf32>
    %cst_28 = arith.constant dense<0.000000e+00> : vector<8xf32>
    %51 = vector.multi_reduction <add>, %50, %cst_28 [1] : vector<8x8xf32> to vector<8xf32>
    %52 = vector.shape_cast %51 : vector<8xf32> to vector<8x1xf32>
    %53 = vector.broadcast %52 : vector<8x1xf32> to vector<8x8xf32>
    %54 = arith.divf %50, %53 : vector<8x8xf32>
    %c1_29 = arith.constant 1 : index
    %c0_30 = arith.constant 0 : index
    %c0_31 = arith.constant 0 : index
    %55 = vector.load %arg8[%c1_29, %c0_30, %c0_31] : memref<2x8x8xf32, #tpu.memory_space<vmem>>, vector<1x8x8xf32>
    %56 = vector.shape_cast %55 : vector<1x8x8xf32> to vector<8x8xf32>
    %57 = vector.shape_cast %54 : vector<8x8xf32> to vector<1x8x8xf32>
    tpu.vector_store %arg8[%c1_29, %c0_30, %c0_31], %57 {strides = array<i32>} : memref<2x8x8xf32, #tpu.memory_space<vmem>>, vector<1x8x8xf32>,
    %cst_32 = arith.constant dense<0.000000e+00> : vector<64x8xf32>
    %58 = tpu.matmul %5, %54, %cst_32 {dimension_numbers = #tpu.dot_dimension_numbers<[1], [1], [0], [0], [0, 0, 1, 0], [], []>} : vector<64x8xf32>, vector<8x8xf32>, vector<64x8xf32> -> vector<64x8xf32>
    %cst_33 = arith.constant dense<0.000000e+00> : vector<64x256xf32>
    %59 = tpu.matmul %58, %44, %cst_33 {dimension_numbers = #tpu.dot_dimension_numbers<[1], [0], [0], [1], [0, 0, 1, 1], [], []>} : vector<64x8xf32>, vector<8x256xf32>, vector<64x256xf32> -> vector<64x256xf32>
    %60 = vector.broadcast %8 : vector<64x1xf32> to vector<64x256xf32>
    %61 = arith.addf %59, %60 : vector<64x256xf32>
    %c1_34 = arith.constant 1 : index
    %c0_35 = arith.constant 0 : index
    %c0_36 = arith.constant 0 : index
    %62 = vector.load %arg7[%c1_34, %c0_35, %c0_36] : memref<2x64x256xf32, #tpu.memory_space<vmem>>, vector<1x64x256xf32>
    %63 = vector.shape_cast %62 : vector<1x64x256xf32> to vector<64x256xf32>
    %64 = vector.shape_cast %61 : vector<64x256xf32> to vector<1x64x256xf32>
    tpu.vector_store %arg7[%c1_34, %c0_35, %c0_36], %64 {strides = array<i32>} : memref<2x64x256xf32, #tpu.memory_space<vmem>>, vector<1x64x256xf32>,
    return
  }
  func.func @transform_0(%arg0: i32) -> (i32, i32, i32) {
    %c0_i32 = arith.constant 0 : i32
    %c0_i32_0 = arith.constant 0 : i32
    %c0_i32_1 = arith.constant 0 : i32
    return %arg0, %c0_i32, %c0_i32_0 : i32, i32, i32
  }
  func.func @transform_1(%arg0: i32) -> (i32, i32) {
    %c0_i32 = arith.constant 0 : i32
    %c0_i32_0 = arith.constant 0 : i32
    %c0_i32_1 = arith.constant 0 : i32
    return %c0_i32, %c0_i32_0 : i32, i32
  }
  func.func @transform_2(%arg0: i32) -> (i32, i32) {
    %c0_i32 = arith.constant 0 : i32
    %c0_i32_0 = arith.constant 0 : i32
    %c0_i32_1 = arith.constant 0 : i32
    return %c0_i32, %c0_i32_0 : i32, i32
  }
  func.func @transform_3(%arg0: i32) -> (i32, i32) {
    %c0_i32 = arith.constant 0 : i32
    %c0_i32_0 = arith.constant 0 : i32
    %c0_i32_1 = arith.constant 0 : i32
    return %c0_i32, %c0_i32_0 : i32, i32
  }
  func.func @transform_4(%arg0: i32) -> (i32, i32) {
    %c0_i32 = arith.constant 0 : i32
    %c0_i32_0 = arith.constant 0 : i32
    %c0_i32_1 = arith.constant 0 : i32
    return %c0_i32, %c0_i32_0 : i32, i32
  }
  func.func @transform_5(%arg0: i32) -> (i32, i32) {
    %c0_i32 = arith.constant 0 : i32
    %c0_i32_0 = arith.constant 0 : i32
    %c0_i32_1 = arith.constant 0 : i32
    return %c0_i32, %c0_i32_0 : i32, i32
  }
  func.func @transform_6(%arg0: i32) -> (i32, i32, i32) {
    %c0_i32 = arith.constant 0 : i32
    %c0_i32_0 = arith.constant 0 : i32
    %c0_i32_1 = arith.constant 0 : i32
    return %arg0, %c0_i32, %c0_i32_0 : i32, i32, i32
  }
  func.func @transform_7(%arg0: i32) -> (i32, i32, i32) {
    %c0_i32 = arith.constant 0 : i32
    %c0_i32_0 = arith.constant 0 : i32
    %c0_i32_1 = arith.constant 0 : i32
    return %arg0, %c0_i32, %c0_i32_0 : i32, i32, i32
  }
}

</mosaic_0001>

<llo_original>
// kernel: tpu_custom_call.1
$region0: #{tpu_custom_call.1}
  #allocation0 [shape = 'u32[]', space=smem, size = 0x4, offset = 0x4, fixed_abs, tag = 'smem constant byte address 0x4 - core index']
  #allocation1 [shape = 'u32[144,128]{1,0:T(1,128)}', space=vmem, size = 0x12000, scoped, tag = 'internal scratch']
  #allocation2 [shape = 'f32[1,1]{1,0:T(1,128)S(6)}', space=smem, size = 0x200, scoped, tag = 'scoped memory for tpu_custom_call.1']
  %s0 = inlined_call_operand.hbm [shape: f32[2,64,256], index: 0, kind: input, shape index: {}]
  %s1 = inlined_call_operand.vmem [shape: f32[24,64], index: 1, kind: input, shape index: {}]
  %s2 = inlined_call_operand.vmem [shape: f32[24,1], index: 2, kind: input, shape index: {}]
  %s3 = inlined_call_operand.vmem [shape: f32[64,8], index: 3, kind: input, shape index: {}]
  %s4 = inlined_call_operand.vmem [shape: f32[64,1], index: 4, kind: input, shape index: {}]
  %s5 = inlined_call_operand.<no memory space> [shape: f32[1,1], index: 5, kind: input, shape index: {}]
  %s6 = inlined_call_operand.hbm [shape: f32[2,64,256], index: 6, kind: output, shape index: {0}]
  %s7 = inlined_call_operand.hbm [shape: f32[2,8,8], index: 7, kind: output, shape index: {1}]
  %8 = xla_tuple %s6, %s7
  %s9 = sld [smem:[#allocation0]]
  $region46: #{tpu_custom_call.1} parent=0
    _
  %s11 = ssub.s32 1, %s9
  %s12 = scalar_select 0, %s11, %s9
  %13 = sst [smem:[#allocation2]] %s5
  $region1: #{tpu_custom_call.1} parent=0
    #allocation3 [shape = 'u8[131072]{0}', space=vmem, size = 0x20000, scoped, tag = 'input window, operand 0, single buffered']
    #allocation4 [shape = 's32[1]{0}', space=sflag, size = 0x4, scoped, tag = 'scoped memory for tpu_custom_call.1']
    #allocation5 [shape = 's32[1]{0}', space=sflag, size = 0x4, scoped, tag = 'scoped memory for tpu_custom_call.1']
    #allocation6 [shape = 'u8[131072]{0}', space=vmem, size = 0x20000, scoped, tag = 'output window, operand 0, single buffered']
    #allocation7 [shape = 'u8[8192]{0}', space=vmem, size = 0x2000, scoped, tag = 'output window, operand 1, single buffered']
    #allocation8 [shape = 's32[1]{0}', space=sflag, size = 0x4, scoped, tag = 'scoped memory for tpu_custom_call.1']
    %14 = vsyncpa [#allocation4], 0
    %15 = vsyncpa [#allocation5], 0
    %16 = vsyncpa [#allocation8], 0
    // Predicated region
    $region2: #{tpu_custom_call.1} parent=1 // pred_check
      _
    $region3: #{tpu_custom_call.1} parent=1 // pred_check_branch
      %18 = sbr.rel (0) target = $region5
    $region4: #{tpu_custom_call.1} parent=1 // pred_region
      %s20 = ssub.s32 4096, 4096
      %21 = vsyncadd [#allocation4], %s20
      %s22 = sshll.u32 [#allocation3], 4
      %s23 = int_to_ptr.vmem [resolvable:$true] %s22
      %28 = dma.hbm_to_vmem [thread:$0]  %s0, 4096, %s23, [#allocation4], 256, 256, 16
    $region5: #{tpu_custom_call.1} parent=1 // pred_fallthru
      _
    // Predicated region
    $region6: #{tpu_custom_call.1} parent=1 // pred_check
      _
    $region7: #{tpu_custom_call.1} parent=1 // pred_check_branch
      %30 = sbr.rel (0) target = $region9
    $region8: #{tpu_custom_call.1} parent=1 // pred_region
      _
    $region9: #{tpu_custom_call.1} parent=1 // pred_fallthru
      _
    // Predicated region
    $region10: #{tpu_custom_call.1} parent=1 // pred_check
      _
    $region11: #{tpu_custom_call.1} parent=1 // pred_check_branch
      %32 = sbr.rel (0) target = $region13
    $region12: #{tpu_custom_call.1} parent=1 // pred_region
      _
    $region13: #{tpu_custom_call.1} parent=1 // pred_fallthru
      _
    // Predicated region
    $region14: #{tpu_custom_call.1} parent=1 // pred_check
      _
    $region15: #{tpu_custom_call.1} parent=1 // pred_check_branch
      %34 = sbr.rel (0) target = $region17
    $region16: #{tpu_custom_call.1} parent=1 // pred_region
      _
    $region17: #{tpu_custom_call.1} parent=1 // pred_fallthru
      _
    // Predicated region
    $region18: #{tpu_custom_call.1} parent=1 // pred_check
      _
    $region19: #{tpu_custom_call.1} parent=1 // pred_check_branch
      %36 = sbr.rel (0) target = $region21
    $region20: #{tpu_custom_call.1} parent=1 // pred_region
      _
    $region21: #{tpu_custom_call.1} parent=1 // pred_fallthru
      _
    // Predicated region
    $region22: #{tpu_custom_call.1} parent=1 // pred_check
      _
    $region23: #{tpu_custom_call.1} parent=1 // pred_check_branch
      %38 = sbr.rel (0) target = $region25
    $region24: #{tpu_custom_call.1} parent=1 // pred_region
      _
    $region25: #{tpu_custom_call.1} parent=1 // pred_fallthru
      _
    // Predicated region
    $region26: #{tpu_custom_call.1} parent=1 // pred_check
      _
    $region27: #{tpu_custom_call.1} parent=1 // pred_check_branch
      %40 = sbr.rel (0) target = $region29
    $region28: #{tpu_custom_call.1} parent=1 // pred_region
      %41 = dma.done [#allocation4], 4096
    $region29: #{tpu_custom_call.1} parent=1 // pred_fallthru
      _
    %s42 = sld [smem:[#allocation2]]
    %v43 = vld [vmem:[%s1] sm:$0xff]
    %v44 = vld [vmem:[%s1 + $0x8] sm:$0xff]
    %v45 = vld [vmem:[%s1 + $0x10] sm:$0xff]
    %v46 = vld [vmem:[%s2] sm:$0xff]
    %v47 = vld [vmem:[%s2 + $0x8] sm:$0xff]
    %v48 = vld [vmem:[%s2 + $0x10] sm:$0xff]
    %v49 = vld [vmem:[%s3] sm:$0xff]
    %v50 = vld [vmem:[%s3 + $0x8] sm:$0xff]
    %v51 = vld [vmem:[%s3 + $0x10] sm:$0xff]
    %v52 = vld [vmem:[%s3 + $0x18] sm:$0xff]
    %v53 = vld [vmem:[%s3 + $0x20] sm:$0xff]
    %v54 = vld [vmem:[%s3 + $0x28] sm:$0xff]
    %v55 = vld [vmem:[%s3 + $0x30] sm:$0xff]
    %v56 = vld [vmem:[%s3 + $0x38] sm:$0xff]
    %v57 = vstv %s42
    %v58 = vmul.f32 %v57, %v49
    %v59 = vmul.f32 %v57, %v50
    %v60 = vmul.f32 %v57, %v51
    %v61 = vmul.f32 %v57, %v52
    %v62 = vmul.f32 %v57, %v53
    %v63 = vmul.f32 %v57, %v54
    %v64 = vmul.f32 %v57, %v55
    %v65 = vmul.f32 %v57, %v56
    %v66 = vld [vmem:[%s4] sm:$0xff]
    %v67 = vld [vmem:[%s4 + $0x8] sm:$0xff]
    %v68 = vld [vmem:[%s4 + $0x10] sm:$0xff]
    %v69 = vld [vmem:[%s4 + $0x18] sm:$0xff]
    %v70 = vld [vmem:[%s4 + $0x20] sm:$0xff]
    %v71 = vld [vmem:[%s4 + $0x28] sm:$0xff]
    %v72 = vld [vmem:[%s4 + $0x30] sm:$0xff]
    %v73 = vld [vmem:[%s4 + $0x38] sm:$0xff]
    %v74 = vmul.f32 %v57, %v66
    %v75 = vmul.f32 %v57, %v67
    %v76 = vmul.f32 %v57, %v68
    %v77 = vmul.f32 %v57, %v69
    %v78 = vmul.f32 %v57, %v70
    %v79 = vmul.f32 %v57, %v71
    %v80 = vmul.f32 %v57, %v72
    %v81 = vmul.f32 %v57, %v73
    %v82 = vld [vmem:[#allocation3] sm:$0xff]
    %v83 = vld [vmem:[#allocation3 + $0x8] sm:$0xff]
    %v84 = vld [vmem:[#allocation3 + $0x10] sm:$0xff]
    %v85 = vld [vmem:[#allocation3 + $0x18] sm:$0xff]
    %v86 = vld [vmem:[#allocation3 + $0x20] sm:$0xff]
    %v87 = vld [vmem:[#allocation3 + $0x28] sm:$0xff]
    %v88 = vld [vmem:[#allocation3 + $0x30] sm:$0xff]
    %v89 = vld [vmem:[#allocation3 + $0x38] sm:$0xff]
    %v90 = vld [vmem:[#allocation3 + $0x40] sm:$0xff]
    %v91 = vld [vmem:[#allocation3 + $0x48] sm:$0xff]
    %v92 = vld [vmem:[#allocation3 + $0x50] sm:$0xff]
    %v93 = vld [vmem:[#allocation3 + $0x58] sm:$0xff]
    %v94 = vld [vmem:[#allocation3 + $0x60] sm:$0xff]
    %v95 = vld [vmem:[#allocation3 + $0x68] sm:$0xff]
    %v96 = vld [vmem:[#allocation3 + $0x70] sm:$0xff]
    %v97 = vld [vmem:[#allocation3 + $0x78] sm:$0xff]
    %99 = vset.pattern.permute.xlu0 0
    %100 = vperm.xlu0 %99, %v46
    %v101 = vpop.permute.xlu0 %100
    %104 = vset.pattern.permute.xlu0 0
    %105 = vperm.xlu0 %104, %v47
    %v106 = vpop.permute.xlu0 %105
    %109 = vset.pattern.permute.xlu0 0
    %110 = vperm.xlu0 %109, %v48
    %v111 = vpop.permute.xlu0 %110
    %vm113 = vcmask 523264
    %v115 = vsel %vm113, %v43, 0
    %v118 = vsel %vm113, %v44, 0
    %v121 = vsel %vm113, %v45, 0
    %123 = vmatprep.subr.mxu0 0.0
    %124 = vmatpush1.msra.mxu0 0.0
    %125 = vmatprep.subr.mxu0 0.0
    %126 = vmatpush1.msra.mxu0 0.0
    %127 = vmatprep.subr.mxu0 0.0
    %128 = vmatpush1.msra.mxu0 0.0
    %129 = vmatprep.subr.mxu0 0.0
    %130 = vmatpush1.msra.mxu0 0.0
    %131 = vmatprep.subr.mxu0 0.0
    %132 = vmatpush1.msra.mxu0 0.0
    %133 = vmatprep.subr.mxu0 0.0
    %134 = vmatpush1.msra.mxu0 0.0
    %135 = vmatprep.subr.mxu0 0.0
    %136 = vmatpush1.msra.mxu0 0.0
    %137 = vmatprep.subr.mxu0 0.0
    %138 = vmatpush1.msra.mxu0 0.0
    %139 = vmatprep.subr.mxu0 %v97
    %140 = vmatpush1.msra.mxu0 %v96
    %141 = vmatprep.subr.mxu0 %v95
    %142 = vmatpush1.msra.mxu0 %v94
    %143 = vmatprep.subr.mxu0 %v93
    %144 = vmatpush1.msra.mxu0 %v92
    %145 = vmatprep.subr.mxu0 %v91
    %146 = vmatpush1.msra.mxu0 %v90
    %147 = vmatprep.subr.mxu0 %v89
    %148 = vmatpush1.msra.mxu0 %v88
    %149 = vmatprep.subr.mxu0 %v87
    %150 = vmatpush1.msra.mxu0 %v86
    %151 = vmatprep.subr.mxu0 %v85
    %152 = vmatpush1.msra.mxu0 %v84
    %153 = vmatprep.subr.mxu0 %v83
    %154 = vmatpush1.msra.mxu0 %v82
    %155 = vmatprep.subr.mxu0 0.0
    %156 = vmatpush2.msra.mxu0 0.0
    %157 = vmatprep.subr.mxu0 0.0
    %158 = vmatpush2.msra.mxu0 0.0
    %159 = vmatprep.subr.mxu0 0.0
    %160 = vmatpush2.msra.mxu0 0.0
    %161 = vmatprep.subr.mxu0 0.0
    %162 = vmatpush2.msra.mxu0 0.0
    %163 = vmatprep.subr.mxu0 0.0
    %164 = vmatpush2.msra.mxu0 0.0
    %165 = vmatprep.subr.mxu0 0.0
    %166 = vmatpush2.msra.mxu0 0.0
    %167 = vmatprep.subr.mxu0 0.0
    %168 = vmatpush2.msra.mxu0 0.0
    %169 = vmatprep.subr.mxu0 0.0
    %170 = vmatpush2.msra.mxu0 0.0
    %171 = vmatprep.subr.mxu0 0.0
    %172 = vmatpush2.msra.mxu0 0.0
    %173 = vmatprep.subr.mxu0 0.0
    %174 = vmatpush2.msra.mxu0 0.0
    %175 = vmatprep.subr.mxu0 0.0
    %176 = vmatpush2.msra.mxu0 0.0
    %177 = vmatprep.subr.mxu0 0.0
    %178 = vmatpush2.msra.mxu0 0.0
    %179 = vmatprep.subr.mxu0 0.0
    %180 = vmatpush2.msra.mxu0 0.0
    %181 = vmatprep.subr.mxu0 0.0
    %182 = vmatpush2.msra.mxu0 0.0
    %183 = vmatprep.subr.mxu0 0.0
    %184 = vmatpush2.msra.mxu0 0.0
    %185 = vmatprep.subr.mxu0 0.0
    %186 = vmatpush2.msra.mxu0 0.0
    %187 = vmatprep.mubr.f32.mxu0 0.0
    %188 = vmatmul.mubr.f32.gmra.mxu0 %v115
    %v189 = vpop.f32.mrf.mxu0
    %v190 = vadd.f32 %v101, %v189
    %v191 = vpop.f32.mrf.mxu0
    %v192 = vadd.f32 %v101, %v191
    %193 = vmatprep.mubr.f32.mxu0 0.0
    %194 = vmatmul.mubr.f32.gmra.mxu0 %v118
    %v195 = vpop.f32.mrf.mxu0
    %v196 = vadd.f32 %v106, %v195
    %v197 = vpop.f32.mrf.mxu0
    %v198 = vadd.f32 %v106, %v197
    %199 = vmatprep.mubr.f32.mxu0 0.0
    %200 = vmatmul.mubr.f32.gmra.mxu0 %v121
    %v201 = vpop.f32.mrf.mxu0
    %v202 = vadd.f32 %v111, %v201
    %v203 = vpop.f32.mrf.mxu0
    %v204 = vadd.f32 %v111, %v203
    %205 = vdwg.mxu0
    %206 = vmatprep.subr.mxu0 0.0
    %207 = vmatpush1.xpose.msra.mxu0 0.0
    %208 = vmatprep.subr.mxu0 0.0
    %209 = vmatpush1.xpose.msra.mxu0 0.0
    %210 = vmatprep.subr.mxu0 0.0
    %211 = vmatpush1.xpose.msra.mxu0 0.0
    %212 = vmatprep.subr.mxu0 0.0
    %213 = vmatpush1.xpose.msra.mxu0 0.0
    %214 = vmatprep.subr.mxu0 0.0
    %215 = vmatpush1.xpose.msra.mxu0 0.0
    %216 = vmatprep.subr.mxu0 0.0
    %217 = vmatpush1.xpose.msra.mxu0 0.0
    %218 = vmatprep.subr.mxu0 0.0
    %219 = vmatpush1.xpose.msra.mxu0 0.0
    %220 = vmatprep.subr.mxu0 0.0
    %221 = vmatpush1.xpose.msra.mxu0 0.0
    %222 = vmatprep.subr.mxu0 0.0
    %223 = vmatpush1.xpose.msra.mxu0 0.0
    %224 = vmatprep.subr.mxu0 0.0
    %225 = vmatpush1.xpose.msra.mxu0 0.0
    %226 = vmatprep.subr.mxu0 0.0
    %227 = vmatpush1.xpose.msra.mxu0 0.0
    %228 = vmatprep.subr.mxu0 0.0
    %229 = vmatpush1.xpose.msra.mxu0 0.0
    %230 = vmatprep.subr.mxu0 0.0
    %231 = vmatpush1.xpose.msra.mxu0 0.0
    %232 = vmatprep.subr.mxu0 0.0
    %233 = vmatpush1.xpose.msra.mxu0 0.0
    %234 = vmatprep.subr.mxu0 0.0
    %235 = vmatpush1.xpose.msra.mxu0 0.0
    %236 = vmatprep.subr.mxu0 %v192
    %237 = vmatpush1.xpose.msra.mxu0 %v190
    %238 = vmatprep.subr.mxu0 0.0
    %239 = vmatpush2.xpose.msra.mxu0 0.0
    %240 = vmatprep.subr.mxu0 0.0
    %241 = vmatpush2.xpose.msra.mxu0 0.0
    %242 = vmatprep.subr.mxu0 0.0
    %243 = vmatpush2.xpose.msra.mxu0 0.0
    %244 = vmatprep.subr.mxu0 0.0
    %245 = vmatpush2.xpose.msra.mxu0 0.0
    %246 = vmatprep.subr.mxu0 0.0
    %247 = vmatpush2.xpose.msra.mxu0 0.0
    %248 = vmatprep.subr.mxu0 0.0
    %249 = vmatpush2.xpose.msra.mxu0 0.0
    %250 = vmatprep.subr.mxu0 0.0
    %251 = vmatpush2.xpose.msra.mxu0 0.0
    %252 = vmatprep.subr.mxu0 0.0
    %253 = vmatpush2.xpose.msra.mxu0 0.0
    %254 = vmatprep.subr.mxu0 0.0
    %255 = vmatpush2.xpose.msra.mxu0 0.0
    %256 = vmatprep.subr.mxu0 0.0
    %257 = vmatpush2.xpose.msra.mxu0 0.0
    %258 = vmatprep.subr.mxu0 0.0
    %259 = vmatpush2.xpose.msra.mxu0 0.0
    %260 = vmatprep.subr.mxu0 0.0
    %261 = vmatpush2.xpose.msra.mxu0 0.0
    %262 = vmatprep.subr.mxu0 0.0
    %263 = vmatpush2.xpose.msra.mxu0 0.0
    %264 = vmatprep.subr.mxu0 0.0
    %265 = vmatpush2.xpose.msra.mxu0 0.0
    %266 = vmatprep.subr.mxu0 0.0
    %267 = vmatpush2.xpose.msra.mxu0 0.0
    %268 = vmatprep.subr.mxu0 0.0
    %269 = vmatpush2.xpose.msra.mxu0 0.0
    %270 = vmatprep.mubr.f32.mxu0 %v198
    %271 = vmatmul.mubr.f32.gmra.mxu0 %v196
    %v272 = vpop.f32.mrf.mxu0
    %v273 = vadd.f32 0.0, %v272
    %v274 = vpop.f32.mrf.mxu0
    %275 = vdwg.mxu0
    %vm276 = vcmask 64512
    %v277 = vsel %vm276, %v273, -inf
    %278 = vmax.xlane.f32.xlu0 %v277
    %v279 = vpop.xlane.xlu0 %278
    %v280 = vsub.f32 %v273, %v279
    %v281 = vmul.f32 %v280, 1.442695
    %v282 = vpow.pop %v281
    %v283 = vsel %vm276, %v282, 0.0
    %284 = vadd.xlane.f32.xlu0 %v283
    %v285 = vpop.xlane.xlu0 %284
    %v286 = vrcp.pop %v285
    %v287 = vmul.f32 %v282, %v286
    %288 = vst.msk [vmem:[#allocation7] sm:$0xff] %vm276, %v287
    %v290 = vsel %vm276, %v58, 0
    %v293 = vsel %vm276, %v59, 0
    %v296 = vsel %vm276, %v60, 0
    %v299 = vsel %vm276, %v61, 0
    %v302 = vsel %vm276, %v62, 0
    %v305 = vsel %vm276, %v63, 0
    %v308 = vsel %vm276, %v64, 0
    %v311 = vsel %vm276, %v65, 0
    %v314 = vsel %vm276, %v287, 0
    %316 = vmatprep.subr.mxu0 0.0
    %317 = vmatpush1.xpose.msra.mxu0 0.0
    %318 = vmatprep.subr.mxu0 0.0
    %319 = vmatpush1.xpose.msra.mxu0 0.0
    %320 = vmatprep.subr.mxu0 0.0
    %321 = vmatpush1.xpose.msra.mxu0 0.0
    %322 = vmatprep.subr.mxu0 0.0
    %323 = vmatpush1.xpose.msra.mxu0 0.0
    %324 = vmatprep.subr.mxu0 0.0
    %325 = vmatpush1.xpose.msra.mxu0 0.0
    %326 = vmatprep.subr.mxu0 0.0
    %327 = vmatpush1.xpose.msra.mxu0 0.0
    %328 = vmatprep.subr.mxu0 0.0
    %329 = vmatpush1.xpose.msra.mxu0 0.0
    %330 = vmatprep.subr.mxu0 0.0
    %331 = vmatpush1.xpose.msra.mxu0 0.0
    %332 = vmatprep.subr.mxu0 0.0
    %333 = vmatpush1.xpose.msra.mxu0 0.0
    %334 = vmatprep.subr.mxu0 0.0
    %335 = vmatpush1.xpose.msra.mxu0 0.0
    %336 = vmatprep.subr.mxu0 0.0
    %337 = vmatpush1.xpose.msra.mxu0 0.0
    %338 = vmatprep.subr.mxu0 0.0
    %339 = vmatpush1.xpose.msra.mxu0 0.0
    %340 = vmatprep.subr.mxu0 0.0
    %341 = vmatpush1.xpose.msra.mxu0 0.0
    %342 = vmatprep.subr.mxu0 0.0
    %343 = vmatpush1.xpose.msra.mxu0 0.0
    %344 = vmatprep.subr.mxu0 0.0
    %345 = vmatpush1.xpose.msra.mxu0 0.0
    %346 = vmatprep.subr.mxu0 0.0
    %347 = vmatpush1.xpose.msra.mxu0 %v314
    %348 = vmatprep.subr.mxu0 0.0
    %349 = vmatpush2.xpose.msra.mxu0 0.0
    %350 = vmatprep.subr.mxu0 0.0
    %351 = vmatpush2.xpose.msra.mxu0 0.0
    %352 = vmatprep.subr.mxu0 0.0
    %353 = vmatpush2.xpose.msra.mxu0 0.0
    %354 = vmatprep.subr.mxu0 0.0
    %355 = vmatpush2.xpose.msra.mxu0 0.0
    %356 = vmatprep.subr.mxu0 0.0
    %357 = vmatpush2.xpose.msra.mxu0 0.0
    %358 = vmatprep.subr.mxu0 0.0
    %359 = vmatpush2.xpose.msra.mxu0 0.0
    %360 = vmatprep.subr.mxu0 0.0
    %361 = vmatpush2.xpose.msra.mxu0 0.0
    %362 = vmatprep.subr.mxu0 0.0
    %363 = vmatpush2.xpose.msra.mxu0 0.0
    %364 = vmatprep.subr.mxu0 0.0
    %365 = vmatpush2.xpose.msra.mxu0 0.0
    %366 = vmatprep.subr.mxu0 0.0
    %367 = vmatpush2.xpose.msra.mxu0 0.0
    %368 = vmatprep.subr.mxu0 0.0
    %369 = vmatpush2.xpose.msra.mxu0 0.0
    %370 = vmatprep.subr.mxu0 0.0
    %371 = vmatpush2.xpose.msra.mxu0 0.0
    %372 = vmatprep.subr.mxu0 0.0
    %373 = vmatpush2.xpose.msra.mxu0 0.0
    %374 = vmatprep.subr.mxu0 0.0
    %375 = vmatpush2.xpose.msra.mxu0 0.0
    %376 = vmatprep.subr.mxu0 0.0
    %377 = vmatpush2.xpose.msra.mxu0 0.0
    %378 = vmatprep.subr.mxu0 0.0
    %379 = vmatpush2.xpose.msra.mxu0 0.0
    %380 = vmatprep.mubr.f32.mxu0 0.0
    %381 = vmatmul.mubr.f32.gmra.mxu0 %v290
    %v382 = vpop.f32.mrf.mxu0
    %v383 = vadd.f32 0.0, %v382
    %v384 = vpop.f32.mrf.mxu0
    %385 = vmatprep.mubr.f32.mxu0 0.0
    %386 = vmatmul.mubr.f32.gmra.mxu0 %v293
    %v387 = vpop.f32.mrf.mxu0
    %v388 = vadd.f32 0.0, %v387
    %v389 = vpop.f32.mrf.mxu0
    %390 = vmatprep.mubr.f32.mxu0 0.0
    %391 = vmatmul.mubr.f32.gmra.mxu0 %v296
    %v392 = vpop.f32.mrf.mxu0
    %v393 = vadd.f32 0.0, %v392
    %v394 = vpop.f32.mrf.mxu0
    %395 = vmatprep.mubr.f32.mxu0 0.0
    %396 = vmatmul.mubr.f32.gmra.mxu0 %v299
    %v397 = vpop.f32.mrf.mxu0
    %v398 = vadd.f32 0.0, %v397
    %v399 = vpop.f32.mrf.mxu0
    %400 = vmatprep.mubr.f32.mxu0 0.0
    %401 = vmatmul.mubr.f32.gmra.mxu0 %v302
    %v402 = vpop.f32.mrf.mxu0
    %v403 = vadd.f32 0.0, %v402
    %v404 = vpop.f32.mrf.mxu0
    %405 = vmatprep.mubr.f32.mxu0 0.0
    %406 = vmatmul.mubr.f32.gmra.mxu0 %v305
    %v407 = vpop.f32.mrf.mxu0
    %v408 = vadd.f32 0.0, %v407
    %v409 = vpop.f32.mrf.mxu0
    %410 = vmatprep.mubr.f32.mxu0 0.0
    %411 = vmatmul.mubr.f32.gmra.mxu0 %v308
    %v412 = vpop.f32.mrf.mxu0
    %v413 = vadd.f32 0.0, %v412
    %v414 = vpop.f32.mrf.mxu0
    %415 = vmatprep.mubr.f32.mxu0 0.0
    %416 = vmatmul.mubr.f32.gmra.mxu0 %v311
    %v417 = vpop.f32.mrf.mxu0
    %v418 = vadd.f32 0.0, %v417
    %v419 = vpop.f32.mrf.mxu0
    %420 = vdwg.mxu0
    %422 = vset.pattern.permute.xlu0 0
    %423 = vperm.xlu0 %422, %v74
    %v424 = vpop.permute.xlu0 %423
    %427 = vset.pattern.permute.xlu0 0
    %428 = vperm.xlu0 %427, %v75
    %v429 = vpop.permute.xlu0 %428
    %432 = vset.pattern.permute.xlu0 0
    %433 = vperm.xlu0 %432, %v76
    %v434 = vpop.permute.xlu0 %433
    %437 = vset.pattern.permute.xlu0 0
    %438 = vperm.xlu0 %437, %v77
    %v439 = vpop.permute.xlu0 %438
    %442 = vset.pattern.permute.xlu0 0
    %443 = vperm.xlu0 %442, %v78
    %v444 = vpop.permute.xlu0 %443
    %447 = vset.pattern.permute.xlu0 0
    %448 = vperm.xlu0 %447, %v79
    %v449 = vpop.permute.xlu0 %448
    %452 = vset.pattern.permute.xlu0 0
    %453 = vperm.xlu0 %452, %v80
    %v454 = vpop.permute.xlu0 %453
    %457 = vset.pattern.permute.xlu0 0
    %458 = vperm.xlu0 %457, %v81
    %v459 = vpop.permute.xlu0 %458
    %v462 = vsel %vm276, %v383, 0
    %v465 = vsel %vm276, %v388, 0
    %v468 = vsel %vm276, %v393, 0
    %v471 = vsel %vm276, %v398, 0
    %v474 = vsel %vm276, %v403, 0
    %v477 = vsel %vm276, %v408, 0
    %v480 = vsel %vm276, %v413, 0
    %v483 = vsel %vm276, %v418, 0
    %485 = vmatprep.subr.mxu0 0.0
    %486 = vmatpush1.msra.mxu0 0.0
    %487 = vmatprep.subr.mxu0 0.0
    %488 = vmatpush1.msra.mxu0 0.0
    %489 = vmatprep.subr.mxu0 0.0
    %490 = vmatpush1.msra.mxu0 0.0
    %491 = vmatprep.subr.mxu0 0.0
    %492 = vmatpush1.msra.mxu0 0.0
    %493 = vmatprep.subr.mxu0 0.0
    %494 = vmatpush1.msra.mxu0 0.0
    %495 = vmatprep.subr.mxu0 0.0
    %496 = vmatpush1.msra.mxu0 0.0
    %497 = vmatprep.subr.mxu0 0.0
    %498 = vmatpush1.msra.mxu0 0.0
    %499 = vmatprep.subr.mxu0 0.0
    %500 = vmatpush1.msra.mxu0 0.0
    %501 = vmatprep.subr.mxu0 0.0
    %502 = vmatpush1.msra.mxu0 0.0
    %503 = vmatprep.subr.mxu0 0.0
    %504 = vmatpush1.msra.mxu0 0.0
    %505 = vmatprep.subr.mxu0 0.0
    %506 = vmatpush1.msra.mxu0 0.0
    %507 = vmatprep.subr.mxu0 0.0
    %508 = vmatpush1.msra.mxu0 0.0
    %509 = vmatprep.subr.mxu0 0.0
    %510 = vmatpush1.msra.mxu0 0.0
    %511 = vmatprep.subr.mxu0 0.0
    %512 = vmatpush1.msra.mxu0 0.0
    %513 = vmatprep.subr.mxu0 0.0
    %514 = vmatpush1.msra.mxu0 0.0
    %515 = vmatprep.subr.mxu0 %v204
    %516 = vmatpush1.msra.mxu0 %v202
    %517 = vmatprep.subr.mxu0 0.0
    %518 = vmatpush2.msra.mxu0 0.0
    %519 = vmatprep.subr.mxu0 0.0
    %520 = vmatpush2.msra.mxu0 0.0
    %521 = vmatprep.subr.mxu0 0.0
    %522 = vmatpush2.msra.mxu0 0.0
    %523 = vmatprep.subr.mxu0 0.0
    %524 = vmatpush2.msra.mxu0 0.0
    %525 = vmatprep.subr.mxu0 0.0
    %526 = vmatpush2.msra.mxu0 0.0
    %527 = vmatprep.subr.mxu0 0.0
    %528 = vmatpush2.msra.mxu0 0.0
    %529 = vmatprep.subr.mxu0 0.0
    %530 = vmatpush2.msra.mxu0 0.0
    %531 = vmatprep.subr.mxu0 0.0
    %532 = vmatpush2.msra.mxu0 0.0
    %533 = vmatprep.subr.mxu0 0.0
    %534 = vmatpush2.msra.mxu0 0.0
    %535 = vmatprep.subr.mxu0 0.0
    %536 = vmatpush2.msra.mxu0 0.0
    %537 = vmatprep.subr.mxu0 0.0
    %538 = vmatpush2.msra.mxu0 0.0
    %539 = vmatprep.subr.mxu0 0.0
    %540 = vmatpush2.msra.mxu0 0.0
    %541 = vmatprep.subr.mxu0 0.0
    %542 = vmatpush2.msra.mxu0 0.0
    %543 = vmatprep.subr.mxu0 0.0
    %544 = vmatpush2.msra.mxu0 0.0
    %545 = vmatprep.subr.mxu0 0.0
    %546 = vmatpush2.msra.mxu0 0.0
    %547 = vmatprep.subr.mxu0 0.0
    %548 = vmatpush2.msra.mxu0 0.0
    %549 = vmatprep.mubr.f32.mxu0 0.0
    %550 = vmatmul.mubr.f32.gmra.mxu0 %v462
    %v551 = vpop.f32.mrf.mxu0
    %v552 = vadd.f32 %v424, %v551
    %v553 = vpop.f32.mrf.mxu0
    %v554 = vadd.f32 %v424, %v553
    %555 = vmatprep.mubr.f32.mxu0 0.0
    %556 = vmatmul.mubr.f32.gmra.mxu0 %v465
    %v557 = vpop.f32.mrf.mxu0
    %v558 = vadd.f32 %v429, %v557
    %v559 = vpop.f32.mrf.mxu0
    %v560 = vadd.f32 %v429, %v559
    %561 = vmatprep.mubr.f32.mxu0 0.0
    %562 = vmatmul.mubr.f32.gmra.mxu0 %v468
    %v563 = vpop.f32.mrf.mxu0
    %v564 = vadd.f32 %v434, %v563
    %v565 = vpop.f32.mrf.mxu0
    %v566 = vadd.f32 %v434, %v565
    %567 = vmatprep.mubr.f32.mxu0 0.0
    %568 = vmatmul.mubr.f32.gmra.mxu0 %v471
    %v569 = vpop.f32.mrf.mxu0
    %v570 = vadd.f32 %v439, %v569
    %v571 = vpop.f32.mrf.mxu0
    %v572 = vadd.f32 %v439, %v571
    %573 = vmatprep.mubr.f32.mxu0 0.0
    %574 = vmatmul.mubr.f32.gmra.mxu0 %v474
    %v575 = vpop.f32.mrf.mxu0
    %v576 = vadd.f32 %v444, %v575
    %v577 = vpop.f32.mrf.mxu0
    %v578 = vadd.f32 %v444, %v577
    %579 = vmatprep.mubr.f32.mxu0 0.0
    %580 = vmatmul.mubr.f32.gmra.mxu0 %v477
    %v581 = vpop.f32.mrf.mxu0
    %v582 = vadd.f32 %v449, %v581
    %v583 = vpop.f32.mrf.mxu0
    %v584 = vadd.f32 %v449, %v583
    %585 = vmatprep.mubr.f32.mxu0 0.0
    %586 = vmatmul.mubr.f32.gmra.mxu0 %v480
    %v587 = vpop.f32.mrf.mxu0
    %v588 = vadd.f32 %v454, %v587
    %v589 = vpop.f32.mrf.mxu0
    %v590 = vadd.f32 %v454, %v589
    %591 = vmatprep.mubr.f32.mxu0 0.0
    %592 = vmatmul.mubr.f32.gmra.mxu0 %v483
    %v593 = vpop.f32.mrf.mxu0
    %v594 = vadd.f32 %v459, %v593
    %v595 = vpop.f32.mrf.mxu0
    %v596 = vadd.f32 %v459, %v595
    %597 = vdwg.mxu0
    %598 = vst [vmem:[#allocation6] sm:$0xff] %v552
    %599 = vst [vmem:[#allocation6 + $0x8] sm:$0xff] %v554
    %600 = vst [vmem:[#allocation6 + $0x10] sm:$0xff] %v558
    %601 = vst [vmem:[#allocation6 + $0x18] sm:$0xff] %v560
    %602 = vst [vmem:[#allocation6 + $0x20] sm:$0xff] %v564
    %603 = vst [vmem:[#allocation6 + $0x28] sm:$0xff] %v566
    %604 = vst [vmem:[#allocation6 + $0x30] sm:$0xff] %v570
    %605 = vst [vmem:[#allocation6 + $0x38] sm:$0xff] %v572
    %606 = vst [vmem:[#allocation6 + $0x40] sm:$0xff] %v576
    %607 = vst [vmem:[#allocation6 + $0x48] sm:$0xff] %v578
    %608 = vst [vmem:[#allocation6 + $0x50] sm:$0xff] %v582
    %609 = vst [vmem:[#allocation6 + $0x58] sm:$0xff] %v584
    %610 = vst [vmem:[#allocation6 + $0x60] sm:$0xff] %v588
    %611 = vst [vmem:[#allocation6 + $0x68] sm:$0xff] %v590
    %612 = vst [vmem:[#allocation6 + $0x70] sm:$0xff] %v594
    %613 = vst [vmem:[#allocation6 + $0x78] sm:$0xff] %v596
    %s614 = scalar_lea.vmem [#allocation3], 128
    %v615 = vld [vmem:[%s614] sm:$0xff]
    %v616 = vld [vmem:[%s614 + $0x8] sm:$0xff]
    %v617 = vld [vmem:[%s614 + $0x10] sm:$0xff]
    %v618 = vld [vmem:[%s614 + $0x18] sm:$0xff]
    %v619 = vld [vmem:[%s614 + $0x20] sm:$0xff]
    %v620 = vld [vmem:[%s614 + $0x28] sm:$0xff]
    %v621 = vld [vmem:[%s614 + $0x30] sm:$0xff]
    %v622 = vld [vmem:[%s614 + $0x38] sm:$0xff]
    %v623 = vld [vmem:[%s614 + $0x40] sm:$0xff]
    %v624 = vld [vmem:[%s614 + $0x48] sm:$0xff]
    %v625 = vld [vmem:[%s614 + $0x50] sm:$0xff]
    %v626 = vld [vmem:[%s614 + $0x58] sm:$0xff]
    %v627 = vld [vmem:[%s614 + $0x60] sm:$0xff]
    %v628 = vld [vmem:[%s614 + $0x68] sm:$0xff]
    %v629 = vld [vmem:[%s614 + $0x70] sm:$0xff]
    %v630 = vld [vmem:[%s614 + $0x78] sm:$0xff]
    %631 = vmatprep.subr.mxu0 0.0
    %632 = vmatpush1.msra.mxu0 0.0
    %633 = vmatprep.subr.mxu0 0.0
    %634 = vmatpush1.msra.mxu0 0.0
    %635 = vmatprep.subr.mxu0 0.0
    %636 = vmatpush1.msra.mxu0 0.0
    %637 = vmatprep.subr.mxu0 0.0
    %638 = vmatpush1.msra.mxu0 0.0
    %639 = vmatprep.subr.mxu0 0.0
    %640 = vmatpush1.msra.mxu0 0.0
    %641 = vmatprep.subr.mxu0 0.0
    %642 = vmatpush1.msra.mxu0 0.0
    %643 = vmatprep.subr.mxu0 0.0
    %644 = vmatpush1.msra.mxu0 0.0
    %645 = vmatprep.subr.mxu0 0.0
    %646 = vmatpush1.msra.mxu0 0.0
    %647 = vmatprep.subr.mxu0 %v630
    %648 = vmatpush1.msra.mxu0 %v629
    %649 = vmatprep.subr.mxu0 %v628
    %650 = vmatpush1.msra.mxu0 %v627
    %651 = vmatprep.subr.mxu0 %v626
    %652 = vmatpush1.msra.mxu0 %v625
    %653 = vmatprep.subr.mxu0 %v624
    %654 = vmatpush1.msra.mxu0 %v623
    %655 = vmatprep.subr.mxu0 %v622
    %656 = vmatpush1.msra.mxu0 %v621
    %657 = vmatprep.subr.mxu0 %v620
    %658 = vmatpush1.msra.mxu0 %v619
    %659 = vmatprep.subr.mxu0 %v618
    %660 = vmatpush1.msra.mxu0 %v617
    %661 = vmatprep.subr.mxu0 %v616
    %662 = vmatpush1.msra.mxu0 %v615
    %663 = vmatprep.subr.mxu0 0.0
    %664 = vmatpush2.msra.mxu0 0.0
    %665 = vmatprep.subr.mxu0 0.0
    %666 = vmatpush2.msra.mxu0 0.0
    %667 = vmatprep.subr.mxu0 0.0
    %668 = vmatpush2.msra.mxu0 0.0
    %669 = vmatprep.subr.mxu0 0.0
    %670 = vmatpush2.msra.mxu0 0.0
    %671 = vmatprep.subr.mxu0 0.0
    %672 = vmatpush2.msra.mxu0 0.0
    %673 = vmatprep.subr.mxu0 0.0
    %674 = vmatpush2.msra.mxu0 0.0
    %675 = vmatprep.subr.mxu0 0.0
    %676 = vmatpush2.msra.mxu0 0.0
    %677 = vmatprep.subr.mxu0 0.0
    %678 = vmatpush2.msra.mxu0 0.0
    %679 = vmatprep.subr.mxu0 0.0
    %680 = vmatpush2.msra.mxu0 0.0
    %681 = vmatprep.subr.mxu0 0.0
    %682 = vmatpush2.msra.mxu0 0.0
    %683 = vmatprep.subr.mxu0 0.0
    %684 = vmatpush2.msra.mxu0 0.0
    %685 = vmatprep.subr.mxu0 0.0
    %686 = vmatpush2.msra.mxu0 0.0
    %687 = vmatprep.subr.mxu0 0.0
    %688 = vmatpush2.msra.mxu0 0.0
    %689 = vmatprep.subr.mxu0 0.0
    %690 = vmatpush2.msra.mxu0 0.0
    %691 = vmatprep.subr.mxu0 0.0
    %692 = vmatpush2.msra.mxu0 0.0
    %693 = vmatprep.subr.mxu0 0.0
    %694 = vmatpush2.msra.mxu0 0.0
    %695 = vmatprep.mubr.f32.mxu0 0.0
    %696 = vmatmul.mubr.f32.gmra.mxu0 %v115
    %v697 = vpop.f32.mrf.mxu0
    %v698 = vadd.f32 %v101, %v697
    %v699 = vpop.f32.mrf.mxu0
    %v700 = vadd.f32 %v101, %v699
    %701 = vmatprep.mubr.f32.mxu0 0.0
    %702 = vmatmul.mubr.f32.gmra.mxu0 %v118
    %v703 = vpop.f32.mrf.mxu0
    %v704 = vadd.f32 %v106, %v703
    %v705 = vpop.f32.mrf.mxu0
    %v706 = vadd.f32 %v106, %v705
    %707 = vmatprep.mubr.f32.mxu0 0.0
    %708 = vmatmul.mubr.f32.gmra.mxu0 %v121
    %v709 = vpop.f32.mrf.mxu0
    %v710 = vadd.f32 %v111, %v709
    %v711 = vpop.f32.mrf.mxu0
    %v712 = vadd.f32 %v111, %v711
    %713 = vdwg.mxu0
    %714 = vmatprep.subr.mxu0 0.0
    %715 = vmatpush1.xpose.msra.mxu0 0.0
    %716 = vmatprep.subr.mxu0 0.0
    %717 = vmatpush1.xpose.msra.mxu0 0.0
    %718 = vmatprep.subr.mxu0 0.0
    %719 = vmatpush1.xpose.msra.mxu0 0.0
    %720 = vmatprep.subr.mxu0 0.0
    %721 = vmatpush1.xpose.msra.mxu0 0.0
    %722 = vmatprep.subr.mxu0 0.0
    %723 = vmatpush1.xpose.msra.mxu0 0.0
    %724 = vmatprep.subr.mxu0 0.0
    %725 = vmatpush1.xpose.msra.mxu0 0.0
    %726 = vmatprep.subr.mxu0 0.0
    %727 = vmatpush1.xpose.msra.mxu0 0.0
    %728 = vmatprep.subr.mxu0 0.0
    %729 = vmatpush1.xpose.msra.mxu0 0.0
    %730 = vmatprep.subr.mxu0 0.0
    %731 = vmatpush1.xpose.msra.mxu0 0.0
    %732 = vmatprep.subr.mxu0 0.0
    %733 = vmatpush1.xpose.msra.mxu0 0.0
    %734 = vmatprep.subr.mxu0 0.0
    %735 = vmatpush1.xpose.msra.mxu0 0.0
    %736 = vmatprep.subr.mxu0 0.0
    %737 = vmatpush1.xpose.msra.mxu0 0.0
    %738 = vmatprep.subr.mxu0 0.0
    %739 = vmatpush1.xpose.msra.mxu0 0.0
    %740 = vmatprep.subr.mxu0 0.0
    %741 = vmatpush1.xpose.msra.mxu0 0.0
    %742 = vmatprep.subr.mxu0 0.0
    %743 = vmatpush1.xpose.msra.mxu0 0.0
    %744 = vmatprep.subr.mxu0 %v700
    %745 = vmatpush1.xpose.msra.mxu0 %v698
    %746 = vmatprep.subr.mxu0 0.0
    %747 = vmatpush2.xpose.msra.mxu0 0.0
    %748 = vmatprep.subr.mxu0 0.0
    %749 = vmatpush2.xpose.msra.mxu0 0.0
    %750 = vmatprep.subr.mxu0 0.0
    %751 = vmatpush2.xpose.msra.mxu0 0.0
    %752 = vmatprep.subr.mxu0 0.0
    %753 = vmatpush2.xpose.msra.mxu0 0.0
    %754 = vmatprep.subr.mxu0 0.0
    %755 = vmatpush2.xpose.msra.mxu0 0.0
    %756 = vmatprep.subr.mxu0 0.0
    %757 = vmatpush2.xpose.msra.mxu0 0.0
    %758 = vmatprep.subr.mxu0 0.0
    %759 = vmatpush2.xpose.msra.mxu0 0.0
    %760 = vmatprep.subr.mxu0 0.0
    %761 = vmatpush2.xpose.msra.mxu0 0.0
    %762 = vmatprep.subr.mxu0 0.0
    %763 = vmatpush2.xpose.msra.mxu0 0.0
    %764 = vmatprep.subr.mxu0 0.0
    %765 = vmatpush2.xpose.msra.mxu0 0.0
    %766 = vmatprep.subr.mxu0 0.0
    %767 = vmatpush2.xpose.msra.mxu0 0.0
    %768 = vmatprep.subr.mxu0 0.0
    %769 = vmatpush2.xpose.msra.mxu0 0.0
    %770 = vmatprep.subr.mxu0 0.0
    %771 = vmatpush2.xpose.msra.mxu0 0.0
    %772 = vmatprep.subr.mxu0 0.0
    %773 = vmatpush2.xpose.msra.mxu0 0.0
    %774 = vmatprep.subr.mxu0 0.0
    %775 = vmatpush2.xpose.msra.mxu0 0.0
    %776 = vmatprep.subr.mxu0 0.0
    %777 = vmatpush2.xpose.msra.mxu0 0.0
    %778 = vmatprep.mubr.f32.mxu0 %v706
    %779 = vmatmul.mubr.f32.gmra.mxu0 %v704
    %v780 = vpop.f32.mrf.mxu0
    %v781 = vadd.f32 0.0, %v780
    %v782 = vpop.f32.mrf.mxu0
    %783 = vdwg.mxu0
    %v784 = vsel %vm276, %v781, -inf
    %785 = vmax.xlane.f32.xlu0 %v784
    %v786 = vpop.xlane.xlu0 %785
    %v787 = vsub.f32 %v781, %v786
    %v788 = vmul.f32 %v787, 1.442695
    %v789 = vpow.pop %v788
    %v790 = vsel %vm276, %v789, 0.0
    %791 = vadd.xlane.f32.xlu0 %v790
    %v792 = vpop.xlane.xlu0 %791
    %v793 = vrcp.pop %v792
    %v794 = vmul.f32 %v789, %v793
    %s795 = scalar_lea.vmem [#allocation7], 8
    %796 = vst.msk [vmem:[%s795] sm:$0xff] %vm276, %v794
    %v798 = vsel %vm276, %v794, 0
    %800 = vmatprep.subr.mxu0 0.0
    %801 = vmatpush1.xpose.msra.mxu0 0.0
    %802 = vmatprep.subr.mxu0 0.0
    %803 = vmatpush1.xpose.msra.mxu0 0.0
    %804 = vmatprep.subr.mxu0 0.0
    %805 = vmatpush1.xpose.msra.mxu0 0.0
    %806 = vmatprep.subr.mxu0 0.0
    %807 = vmatpush1.xpose.msra.mxu0 0.0
    %808 = vmatprep.subr.mxu0 0.0
    %809 = vmatpush1.xpose.msra.mxu0 0.0
    %810 = vmatprep.subr.mxu0 0.0
    %811 = vmatpush1.xpose.msra.mxu0 0.0
    %812 = vmatprep.subr.mxu0 0.0
    %813 = vmatpush1.xpose.msra.mxu0 0.0
    %814 = vmatprep.subr.mxu0 0.0
    %815 = vmatpush1.xpose.msra.mxu0 0.0
    %816 = vmatprep.subr.mxu0 0.0
    %817 = vmatpush1.xpose.msra.mxu0 0.0
    %818 = vmatprep.subr.mxu0 0.0
    %819 = vmatpush1.xpose.msra.mxu0 0.0
    %820 = vmatprep.subr.mxu0 0.0
    %821 = vmatpush1.xpose.msra.mxu0 0.0
    %822 = vmatprep.subr.mxu0 0.0
    %823 = vmatpush1.xpose.msra.mxu0 0.0
    %824 = vmatprep.subr.mxu0 0.0
    %825 = vmatpush1.xpose.msra.mxu0 0.0
    %826 = vmatprep.subr.mxu0 0.0
    %827 = vmatpush1.xpose.msra.mxu0 0.0
    %828 = vmatprep.subr.mxu0 0.0
    %829 = vmatpush1.xpose.msra.mxu0 0.0
    %830 = vmatprep.subr.mxu0 0.0
    %831 = vmatpush1.xpose.msra.mxu0 %v798
    %832 = vmatprep.subr.mxu0 0.0
    %833 = vmatpush2.xpose.msra.mxu0 0.0
    %834 = vmatprep.subr.mxu0 0.0
    %835 = vmatpush2.xpose.msra.mxu0 0.0
    %836 = vmatprep.subr.mxu0 0.0
    %837 = vmatpush2.xpose.msra.mxu0 0.0
    %838 = vmatprep.subr.mxu0 0.0
    %839 = vmatpush2.xpose.msra.mxu0 0.0
    %840 = vmatprep.subr.mxu0 0.0
    %841 = vmatpush2.xpose.msra.mxu0 0.0
    %842 = vmatprep.subr.mxu0 0.0
    %843 = vmatpush2.xpose.msra.mxu0 0.0
    %844 = vmatprep.subr.mxu0 0.0
    %845 = vmatpush2.xpose.msra.mxu0 0.0
    %846 = vmatprep.subr.mxu0 0.0
    %847 = vmatpush2.xpose.msra.mxu0 0.0
    %848 = vmatprep.subr.mxu0 0.0
    %849 = vmatpush2.xpose.msra.mxu0 0.0
    %850 = vmatprep.subr.mxu0 0.0
    %851 = vmatpush2.xpose.msra.mxu0 0.0
    %852 = vmatprep.subr.mxu0 0.0
    %853 = vmatpush2.xpose.msra.mxu0 0.0
    %854 = vmatprep.subr.mxu0 0.0
    %855 = vmatpush2.xpose.msra.mxu0 0.0
    %856 = vmatprep.subr.mxu0 0.0
    %857 = vmatpush2.xpose.msra.mxu0 0.0
    %858 = vmatprep.subr.mxu0 0.0
    %859 = vmatpush2.xpose.msra.mxu0 0.0
    %860 = vmatprep.subr.mxu0 0.0
    %861 = vmatpush2.xpose.msra.mxu0 0.0
    %862 = vmatprep.subr.mxu0 0.0
    %863 = vmatpush2.xpose.msra.mxu0 0.0
    %864 = vmatprep.mubr.f32.mxu0 0.0
    %865 = vmatmul.mubr.f32.gmra.mxu0 %v290
    %v866 = vpop.f32.mrf.mxu0
    %v867 = vadd.f32 0.0, %v866
    %v868 = vpop.f32.mrf.mxu0
    %869 = vmatprep.mubr.f32.mxu0 0.0
    %870 = vmatmul.mubr.f32.gmra.mxu0 %v293
    %v871 = vpop.f32.mrf.mxu0
    %v872 = vadd.f32 0.0, %v871
    %v873 = vpop.f32.mrf.mxu0
    %874 = vmatprep.mubr.f32.mxu0 0.0
    %875 = vmatmul.mubr.f32.gmra.mxu0 %v296
    %v876 = vpop.f32.mrf.mxu0
    %v877 = vadd.f32 0.0, %v876
    %v878 = vpop.f32.mrf.mxu0
    %879 = vmatprep.mubr.f32.mxu0 0.0
    %880 = vmatmul.mubr.f32.gmra.mxu0 %v299
    %v881 = vpop.f32.mrf.mxu0
    %v882 = vadd.f32 0.0, %v881
    %v883 = vpop.f32.mrf.mxu0
    %884 = vmatprep.mubr.f32.mxu0 0.0
    %885 = vmatmul.mubr.f32.gmra.mxu0 %v302
    %v886 = vpop.f32.mrf.mxu0
    %v887 = vadd.f32 0.0, %v886
    %v888 = vpop.f32.mrf.mxu0
    %889 = vmatprep.mubr.f32.mxu0 0.0
    %890 = vmatmul.mubr.f32.gmra.mxu0 %v305
    %v891 = vpop.f32.mrf.mxu0
    %v892 = vadd.f32 0.0, %v891
    %v893 = vpop.f32.mrf.mxu0
    %894 = vmatprep.mubr.f32.mxu0 0.0
    %895 = vmatmul.mubr.f32.gmra.mxu0 %v308
    %v896 = vpop.f32.mrf.mxu0
    %v897 = vadd.f32 0.0, %v896
    %v898 = vpop.f32.mrf.mxu0
    %899 = vmatprep.mubr.f32.mxu0 0.0
    %900 = vmatmul.mubr.f32.gmra.mxu0 %v311
    %v901 = vpop.f32.mrf.mxu0
    %v902 = vadd.f32 0.0, %v901
    %v903 = vpop.f32.mrf.mxu0
    %904 = vdwg.mxu0
    %v906 = vsel %vm276, %v867, 0
    %v909 = vsel %vm276, %v872, 0
    %v912 = vsel %vm276, %v877, 0
    %v915 = vsel %vm276, %v882, 0
    %v918 = vsel %vm276, %v887, 0
    %v921 = vsel %vm276, %v892, 0
    %v924 = vsel %vm276, %v897, 0
    %v927 = vsel %vm276, %v902, 0
    %929 = vmatprep.subr.mxu0 0.0
    %930 = vmatpush1.msra.mxu0 0.0
    %931 = vmatprep.subr.mxu0 0.0
    %932 = vmatpush1.msra.mxu0 0.0
    %933 = vmatprep.subr.mxu0 0.0
    %934 = vmatpush1.msra.mxu0 0.0
    %935 = vmatprep.subr.mxu0 0.0
    %936 = vmatpush1.msra.mxu0 0.0
    %937 = vmatprep.subr.mxu0 0.0
    %938 = vmatpush1.msra.mxu0 0.0
    %939 = vmatprep.subr.mxu0 0.0
    %940 = vmatpush1.msra.mxu0 0.0
    %941 = vmatprep.subr.mxu0 0.0
    %942 = vmatpush1.msra.mxu0 0.0
    %943 = vmatprep.subr.mxu0 0.0
    %944 = vmatpush1.msra.mxu0 0.0
    %945 = vmatprep.subr.mxu0 0.0
    %946 = vmatpush1.msra.mxu0 0.0
    %947 = vmatprep.subr.mxu0 0.0
    %948 = vmatpush1.msra.mxu0 0.0
    %949 = vmatprep.subr.mxu0 0.0
    %950 = vmatpush1.msra.mxu0 0.0
    %951 = vmatprep.subr.mxu0 0.0
    %952 = vmatpush1.msra.mxu0 0.0
    %953 = vmatprep.subr.mxu0 0.0
    %954 = vmatpush1.msra.mxu0 0.0
    %955 = vmatprep.subr.mxu0 0.0
    %956 = vmatpush1.msra.mxu0 0.0
    %957 = vmatprep.subr.mxu0 0.0
    %958 = vmatpush1.msra.mxu0 0.0
    %959 = vmatprep.subr.mxu0 %v712
    %960 = vmatpush1.msra.mxu0 %v710
    %961 = vmatprep.subr.mxu0 0.0
    %962 = vmatpush2.msra.mxu0 0.0
    %963 = vmatprep.subr.mxu0 0.0
    %964 = vmatpush2.msra.mxu0 0.0
    %965 = vmatprep.subr.mxu0 0.0
    %966 = vmatpush2.msra.mxu0 0.0
    %967 = vmatprep.subr.mxu0 0.0
    %968 = vmatpush2.msra.mxu0 0.0
    %969 = vmatprep.subr.mxu0 0.0
    %970 = vmatpush2.msra.mxu0 0.0
    %971 = vmatprep.subr.mxu0 0.0
    %972 = vmatpush2.msra.mxu0 0.0
    %973 = vmatprep.subr.mxu0 0.0
    %974 = vmatpush2.msra.mxu0 0.0
    %975 = vmatprep.subr.mxu0 0.0
    %976 = vmatpush2.msra.mxu0 0.0
    %977 = vmatprep.subr.mxu0 0.0
    %978 = vmatpush2.msra.mxu0 0.0
    %979 = vmatprep.subr.mxu0 0.0
    %980 = vmatpush2.msra.mxu0 0.0
    %981 = vmatprep.subr.mxu0 0.0
    %982 = vmatpush2.msra.mxu0 0.0
    %983 = vmatprep.subr.mxu0 0.0
    %984 = vmatpush2.msra.mxu0 0.0
    %985 = vmatprep.subr.mxu0 0.0
    %986 = vmatpush2.msra.mxu0 0.0
    %987 = vmatprep.subr.mxu0 0.0
    %988 = vmatpush2.msra.mxu0 0.0
    %989 = vmatprep.subr.mxu0 0.0
    %990 = vmatpush2.msra.mxu0 0.0
    %991 = vmatprep.subr.mxu0 0.0
    %992 = vmatpush2.msra.mxu0 0.0
    %993 = vmatprep.mubr.f32.mxu0 0.0
    %994 = vmatmul.mubr.f32.gmra.mxu0 %v906
    %v995 = vpop.f32.mrf.mxu0
    %v996 = vadd.f32 %v424, %v995
    %v997 = vpop.f32.mrf.mxu0
    %v998 = vadd.f32 %v424, %v997
    %999 = vmatprep.mubr.f32.mxu0 0.0
    %1000 = vmatmul.mubr.f32.gmra.mxu0 %v909
    %v1001 = vpop.f32.mrf.mxu0
    %v1002 = vadd.f32 %v429, %v1001
    %v1003 = vpop.f32.mrf.mxu0
    %v1004 = vadd.f32 %v429, %v1003
    %1005 = vmatprep.mubr.f32.mxu0 0.0
    %1006 = vmatmul.mubr.f32.gmra.mxu0 %v912
    %v1007 = vpop.f32.mrf.mxu0
    %v1008 = vadd.f32 %v434, %v1007
    %v1009 = vpop.f32.mrf.mxu0
    %v1010 = vadd.f32 %v434, %v1009
    %1011 = vmatprep.mubr.f32.mxu0 0.0
    %1012 = vmatmul.mubr.f32.gmra.mxu0 %v915
    %v1013 = vpop.f32.mrf.mxu0
    %v1014 = vadd.f32 %v439, %v1013
    %v1015 = vpop.f32.mrf.mxu0
    %v1016 = vadd.f32 %v439, %v1015
    %1017 = vmatprep.mubr.f32.mxu0 0.0
    %1018 = vmatmul.mubr.f32.gmra.mxu0 %v918
    %v1019 = vpop.f32.mrf.mxu0
    %v1020 = vadd.f32 %v444, %v1019
    %v1021 = vpop.f32.mrf.mxu0
    %v1022 = vadd.f32 %v444, %v1021
    %1023 = vmatprep.mubr.f32.mxu0 0.0
    %1024 = vmatmul.mubr.f32.gmra.mxu0 %v921
    %v1025 = vpop.f32.mrf.mxu0
    %v1026 = vadd.f32 %v449, %v1025
    %v1027 = vpop.f32.mrf.mxu0
    %v1028 = vadd.f32 %v449, %v1027
    %1029 = vmatprep.mubr.f32.mxu0 0.0
    %1030 = vmatmul.mubr.f32.gmra.mxu0 %v924
    %v1031 = vpop.f32.mrf.mxu0
    %v1032 = vadd.f32 %v454, %v1031
    %v1033 = vpop.f32.mrf.mxu0
    %v1034 = vadd.f32 %v454, %v1033
    %1035 = vmatprep.mubr.f32.mxu0 0.0
    %1036 = vmatmul.mubr.f32.gmra.mxu0 %v927
    %v1037 = vpop.f32.mrf.mxu0
    %v1038 = vadd.f32 %v459, %v1037
    %v1039 = vpop.f32.mrf.mxu0
    %v1040 = vadd.f32 %v459, %v1039
    %1041 = vdwg.mxu0
    %s1042 = scalar_lea.vmem [#allocation6], 128
    %1043 = vst [vmem:[%s1042] sm:$0xff] %v996
    %1044 = vst [vmem:[%s1042 + $0x8] sm:$0xff] %v998
    %1045 = vst [vmem:[%s1042 + $0x10] sm:$0xff] %v1002
    %1046 = vst [vmem:[%s1042 + $0x18] sm:$0xff] %v1004
    %1047 = vst [vmem:[%s1042 + $0x20] sm:$0xff] %v1008
    %1048 = vst [vmem:[%s1042 + $0x28] sm:$0xff] %v1010
    %1049 = vst [vmem:[%s1042 + $0x30] sm:$0xff] %v1014
    %1050 = vst [vmem:[%s1042 + $0x38] sm:$0xff] %v1016
    %1051 = vst [vmem:[%s1042 + $0x40] sm:$0xff] %v1020
    %1052 = vst [vmem:[%s1042 + $0x48] sm:$0xff] %v1022
    %1053 = vst [vmem:[%s1042 + $0x50] sm:$0xff] %v1026
    %1054 = vst [vmem:[%s1042 + $0x58] sm:$0xff] %v1028
    %1055 = vst [vmem:[%s1042 + $0x60] sm:$0xff] %v1032
    %1056 = vst [vmem:[%s1042 + $0x68] sm:$0xff] %v1034
    %1057 = vst [vmem:[%s1042 + $0x70] sm:$0xff] %v1038
    %1058 = vst [vmem:[%s1042 + $0x78] sm:$0xff] %v1040
    // Predicated region
    $region30: #{tpu_custom_call.1} parent=1 // pred_check
      _
    $region31: #{tpu_custom_call.1} parent=1 // pred_check_branch
      %1060 = sbr.rel (0) target = $region33
    $region32: #{tpu_custom_call.1} parent=1 // pred_region
      %s1062 = ssub.s32 4096, 4096
      %1063 = vsyncadd [#allocation5], %s1062
      %s1064 = sshll.u32 [#allocation6], 4
      %s1065 = int_to_ptr.vmem [resolvable:$true] %s1064
      %1070 = dma.vmem_to_hbm [thread:$0]  %s1065, 4096, %s6, [#allocation5], 256, 256, 16
    $region33: #{tpu_custom_call.1} parent=1 // pred_fallthru
      _
    // Predicated region
    $region34: #{tpu_custom_call.1} parent=1 // pred_check
      _
    $region35: #{tpu_custom_call.1} parent=1 // pred_check_branch
      %1072 = sbr.rel (0) target = $region37
    $region36: #{tpu_custom_call.1} parent=1 // pred_region
      %s1074 = ssub.s32 256, 256
      %1075 = vsyncadd [#allocation8], %s1074
      %s1076 = sshll.u32 [#allocation7], 4
      %s1077 = int_to_ptr.vmem [resolvable:$true] %s1076
      %1082 = dma.vmem_to_hbm [thread:$0]  %s1077, 256, %s7, [#allocation8], 128, 128, 8
    $region37: #{tpu_custom_call.1} parent=1 // pred_fallthru
      _
    // Predicated region
    $region38: #{tpu_custom_call.1} parent=1 // pred_check
      _
    $region39: #{tpu_custom_call.1} parent=1 // pred_check_branch
      %1084 = sbr.rel (0) target = $region41
    $region40: #{tpu_custom_call.1} parent=1 // pred_region
      %1085 = dma.done [#allocation5], 4096
    $region41: #{tpu_custom_call.1} parent=1 // pred_fallthru
      _
    // Predicated region
    $region42: #{tpu_custom_call.1} parent=1 // pred_check
      _
    $region43: #{tpu_custom_call.1} parent=1 // pred_check_branch
      %1087 = sbr.rel (0) target = $region45
    $region44: #{tpu_custom_call.1} parent=1 // pred_region
      %1088 = dma.done [#allocation8], 256
    $region45: #{tpu_custom_call.1} parent=1 // pred_fallthru
      _
    %1089 = vsyncpa [#allocation4], 1
    %1090 = vsyncpa [#allocation5], 1
    %1091 = vsyncpa [#allocation8], 1

</llo_original>
